<compile_context>
chip_gen: v6e
topology: v6e:2x2x1
jax: 0.10.0
libtpu: 0.0.40
codegen_flags: <defaults>
</compile_context>

<pallas_src>
import numpy as np
import jax
import jax.numpy as jnp
from jax.experimental import pallas as pl
from jax.experimental.pallas import tpu as pltpu


def _upsample_kernel(x_ref, w_ref, b_ref, o_ref):
    # x_ref : (1, H+2, W+2, C)   zero-padded NHWC input (compute dtype)
    # w_ref : (9, C, 4C)         per-tap weights, tap t = dh*3 + dw; cols = (r, s, co)
    # b_ref : (1, 4C)            bias tiled over the 4 output phases (float32)
    # o_ref : (1, TH*W, 4C)      fused output: row p*W+q, col (2r+s)*C + co
    THW = o_ref.shape[1]
    C = w_ref.shape[1]
    W = x_ref.shape[2] - 2
    TH = THW // W

    row0 = pl.multiple_of(pl.program_id(1) * TH, TH)
    xt = x_ref[0, pl.ds(row0, TH + 2)]                      # (TH+2, W+2, C)

    # Hoist the 3 W-direction (sublane) shifts out of the tap loop and flatten the
    # spatial dims once per shift; the 9 taps then become cheap row-range slices.
    cols = [xt[:, dw:dw + W, :].reshape((TH + 2) * W, C) for dw in range(3)]

    # Fused contraction over all 9 taps and all 4 output phases, f32 accumulation:
    #   y[(p,q), (r,s,co)] = sum_t tap_t[(p,q), ci] @ w_t[ci, (r,s,co)]
    acc = jnp.dot(cols[0][0:THW], w_ref[0],
                  preferred_element_type=jnp.float32)       # (TH*W, 4C)
    for t in range(1, 9):
        dh, dw = divmod(t, 3)
        tap = cols[dw][dh * W: dh * W + THW]                # (TH*W, C)
        acc = acc + jnp.dot(tap, w_ref[t],
                            preferred_element_type=jnp.float32)

    # Bias add hoisted out of the phase loop; single lane-dense (4C-wide) store.
    o_ref[0] = (acc + b_ref[...]).astype(o_ref.dtype)


def _build_fused_weight(weight, C):
    """PyTorch ConvTranspose2d weight (C_in, C_out, 4, 4) -> (9, C_in, 4*C_out).

    Tap t = dh*3 + dw (dh, dw in {0,1,2}); output columns ordered (r, s, co).
    w[dh, dw, ci, r, s, co] = weight[ci, co, 3-r-2a, 3-s-2b] with (a, b) = (dh-r, dw-s)
    when a, b in {0,1}, else 0.
    """
    w = jnp.zeros((3, 3, C, 2, 2, C), jnp.float32)
    wf = weight.astype(jnp.float32)
    for r in range(2):
        for s in range(2):
            for a in range(2):
                for b in range(2):
                    w = w.at[r + a, s + b, :, r, s, :].set(
                        wf[:, :, 3 - r - 2 * a, 3 - s - 2 * b])
    return w.reshape(9, C, 4 * C)


def _choose_tile_h(H, W, C, compute_itemsize, out_itemsize,
                   vmem_budget=32 * 1024 * 1024):
    """Largest divisor of H whose per-step temporaries fit a conservative VMEM budget
    and that keeps the output block's second-to-last dim (TH*W) a multiple of 8."""
    # whole padded image + fused weights stay resident (double-buffered input blocks)
    fixed = (2 * (H + 2) * (W + 2) * C * compute_itemsize
             + 2 * 9 * C * 4 * C * compute_itemsize)
    # shifted views + f32 accumulator + cast result + double-buffered output block
    per_row = W * C * (4 * compute_itemsize + 16 + 12 * out_itemsize)
    cap = max(1, (vmem_budget - fixed) // per_row) if vmem_budget > fixed else 1
    valid = [d for d in range(1, H + 1)
             if H % d == 0 and (d == H or (d * W) % 8 == 0)]
    under = [d for d in valid if d <= cap]
    return int(max(under) if under else min(valid))
    # NOTE: for extremely large feature maps the whole-image input block itself may
    # exceed VMEM; that case needs halo row-tiling of the input (manual DMA), which is
    # not required for typical UNet upsample shapes.


def _upsample_fused_nhwc(x_nhwc, weight, bias, *, tile_h=None,
                         compute_dtype=jnp.bfloat16):
    """Core pallas call. Returns phases (N, H, W, 2, 2, C): [n, p, q, r, s, c]."""
    N, H, W, C = x_nhwc.shape
    out_dtype = x_nhwc.dtype
    cdt = jnp.dtype(compute_dtype) if compute_dtype is not None else jnp.dtype(out_dtype)

    x_pad = jnp.pad(x_nhwc, ((0, 0), (1, 1), (1, 1), (0, 0))).astype(cdt)
    w_cat = _build_fused_weight(weight, C).astype(cdt)                # (9, C, 4C)
    b_cat = jnp.tile(bias.astype(jnp.float32).reshape(1, C), (1, 4))  # (1, 4C)

    if tile_h is None:
        tile_h = _choose_tile_h(H, W, C, cdt.itemsize, jnp.dtype(out_dtype).itemsize)
    TH = int(tile_h)
    if H % TH != 0:
        raise ValueError(f"tile_h={TH} must divide H={H}")
    if TH < H and (TH * W) % 8 != 0:
        raise ValueError(f"tile_h*W={TH * W} must be a multiple of 8 when tile_h < H")

    fused = pl.pallas_call(
        _upsample_kernel,
        out_shape=jax.ShapeDtypeStruct((N, H * W, 4 * C), out_dtype),
        grid_spec=pltpu.PrefetchScalarGridSpec(
            num_scalar_prefetch=0,
            grid=(N, H // TH),
            in_specs=[
                # whole padded image per batch element; index map ignores the row-tile
                # axis so Pallas re-uses the resident block (one DMA per batch element)
                pl.BlockSpec((1, H + 2, W + 2, C), lambda n, i: (n, 0, 0, 0)),
                pl.BlockSpec((9, C, 4 * C), lambda n, i: (0, 0, 0)),
                pl.BlockSpec((1, 4 * C), lambda n, i: (0, 0)),
            ],
            out_specs=pl.BlockSpec((1, TH * W, 4 * C), lambda n, i: (n, i, 0)),
        ),
        compiler_params=pltpu.CompilerParams(
            dimension_semantics=("parallel", "parallel"),
            vmem_limit_bytes=64 * 1024 * 1024),
    )(x_pad, w_cat, b_cat)
    return fused.reshape(N, H, W, 2, 2, C)


def upsample_conv_transpose_nhwc(x_nhwc, weight, bias, *, tile_h=None,
                                 compute_dtype=jnp.bfloat16):
    """NHWC entry point: (N, H, W, C) -> (N, 2H, 2W, C)."""
    N, H, W, C = x_nhwc.shape
    ph = _upsample_fused_nhwc(x_nhwc, weight, bias, tile_h=tile_h,
                              compute_dtype=compute_dtype)
    # [n, p, q, r, s, c] -> [n, 2p+r, 2q+s, c]: one transpose + free reshape
    return jnp.transpose(ph, (0, 1, 3, 2, 4, 5)).reshape(N, 2 * H, 2 * W, C)


def upsample_conv_transpose(x_nchw, weight, bias, *, tile_h=None,
                            compute_dtype=jnp.bfloat16):
    """Equivalent of nn.ConvTranspose2d(C, C, (4,4), (2,2), (1,1)) forward.

    x_nchw : (N, C, H, W), weight : (C, C, 4, 4), bias : (C,)
    returns (N, C, 2H, 2W)
    """
    N, C, H, W = x_nchw.shape
    x = jnp.transpose(x_nchw, (0, 2, 3, 1))                 # NCHW -> NHWC
    ph = _upsample_fused_nhwc(x, weight, bias, tile_h=tile_h,
                              compute_dtype=compute_dtype)
    # [n, p, q, r, s, c] -> NCHW [n, c, 2p+r, 2q+s]: one transpose + free reshape
    return jnp.transpose(ph, (0, 5, 1, 3, 2, 4)).reshape(N, C, 2 * H, 2 * W)


def _reference_conv_transpose(x, weight, bias):
    """Direct NumPy reference of PyTorch ConvTranspose2d((4,4),(2,2),(1,1))."""
    N, C, H, W = x.shape
    out = np.zeros((N, C, 2 * H, 2 * W), np.float32)
    for ih in range(H):
        for iw in range(W):
            for kh in range(4):
                for kw in range(4):
                    oh = 2 * ih - 1 + kh
                    ow = 2 * iw - 1 + kw
                    if 0 <= oh < 2 * H and 0 <= ow < 2 * W:
                        out[:, :, oh, ow] += x[:, :, ih, iw] @ weight[:, :, kh, kw]
    out += bias[None, :, None, None]
    return out


if __name__ == "__main__":
    N, C, H, W = 2, 8, 8, 8
    key = jax.random.PRNGKey(0)
    kx, kw, kb = jax.random.split(key, 3)

    x = jax.random.normal(kx, (N, C, H, W), dtype=jnp.float32)
    weight = 0.1 * jax.random.normal(kw, (C, C, 4, 4), dtype=jnp.float32)  # (C_in, C_out, 4, 4)
    bias = 0.1 * jax.random.normal(kb, (C,), dtype=jnp.float32)

    ref = _reference_conv_transpose(np.asarray(x), np.asarray(weight), np.asarray(bias))

    # default path: bf16 compute, auto row-tile
    out = jax.block_until_ready(upsample_conv_transpose(x, weight, bias))
    assert out.shape == (N, C, 2 * H, 2 * W), out.shape
    np.testing.assert_allclose(np.asarray(out), ref, atol=2e-2, rtol=2e-2)

    # f32 compute + explicit multi-row-tile path (exercises grid axis 1 > 1)
    out32 = jax.block_until_ready(
        upsample_conv_transpose(x, weight, bias, tile_h=4, compute_dtype=jnp.float32))
    np.testing.assert_allclose(np.asarray(out32), ref, atol=1e-2, rtol=1e-2)

    # NHWC entry point (no NCHW glue for channels-last callers)
    x_nhwc = jnp.transpose(x, (0, 2, 3, 1))
    out_nhwc = jax.block_until_ready(upsample_conv_transpose_nhwc(x_nhwc, weight, bias))
    np.testing.assert_allclose(np.asarray(jnp.transpose(out_nhwc, (0, 3, 1, 2))),
                               ref, atol=2e-2, rtol=2e-2)

    print("KERNEL_OK")
</pallas_src>

<mosaic_0001>
module attributes {stable_mosaic.version = 11 : i64} {
  func.func @_upsample_kernel(%arg0: i32, %arg1: i32, %arg2: memref<1x10x10x8xbf16, #tpu.memory_space<vmem>>, %arg3: memref<9x8x32xbf16, #tpu.memory_space<vmem>>, %arg4: memref<1x32xf32, #tpu.memory_space<vmem>>, %arg5: memref<1x64x32xf32, #tpu.memory_space<vmem>>) attributes {dimension_semantics = [#tpu.dimension_semantics<parallel>, #tpu.dimension_semantics<parallel>], iteration_bounds = array<i64: 2, 1>, scalar_prefetch = 0 : i64, scratch_operands = 0 : i64, tpu.core_type = #tpu.core_type<tc>, window_params = [{transform_indices = @transform_0, window_bounds = array<i64: 1, 10, 10, 8>}, {pipeline_mode = #tpu.pipeline_mode<synchronous>, transform_indices = @transform_1, window_bounds = array<i64: 9, 8, 32>}, {pipeline_mode = #tpu.pipeline_mode<synchronous>, transform_indices = @transform_2, window_bounds = array<i64: 1, 32>}, {transform_indices = @transform_3, window_bounds = array<i64: 1, 64, 32>}]} {
    %c8_i32 = arith.constant 8 : i32
    %0 = arith.muli %arg1, %c8_i32 : i32
    %1 = tpu.assume_multiple %0, 8 : i32
    %c0 = arith.constant 0 : index
    %2 = arith.index_cast %1 : i32 to index
    %c0_0 = arith.constant 0 : index
    %c0_1 = arith.constant 0 : index
    %3 = vector.load %arg2[%c0, %2, %c0_0, %c0_1] : memref<1x10x10x8xbf16, #tpu.memory_space<vmem>>, vector<1x10x10x8xbf16>
    %4 = vector.shape_cast %3 : vector<1x10x10x8xbf16> to vector<10x10x8xbf16>
    %5 = vector.extract_strided_slice %4 {offsets = [0, 0, 0], sizes = [10, 8, 8], strides = [1, 1, 1]} : vector<10x10x8xbf16> to vector<10x8x8xbf16>
    %6 = vector.shape_cast %5 : vector<10x8x8xbf16> to vector<80x8xbf16>
    %7 = vector.extract_strided_slice %4 {offsets = [0, 1, 0], sizes = [10, 8, 8], strides = [1, 1, 1]} : vector<10x10x8xbf16> to vector<10x8x8xbf16>
    %8 = vector.shape_cast %7 : vector<10x8x8xbf16> to vector<80x8xbf16>
    %9 = vector.extract_strided_slice %4 {offsets = [0, 2, 0], sizes = [10, 8, 8], strides = [1, 1, 1]} : vector<10x10x8xbf16> to vector<10x8x8xbf16>
    %10 = vector.shape_cast %9 : vector<10x8x8xbf16> to vector<80x8xbf16>
    %11 = vector.extract_strided_slice %6 {offsets = [0, 0], sizes = [64, 8], strides = [1, 1]} : vector<80x8xbf16> to vector<64x8xbf16>
    %c0_2 = arith.constant 0 : index
    %c0_3 = arith.constant 0 : index
    %c0_4 = arith.constant 0 : index
    %12 = vector.load %arg3[%c0_2, %c0_3, %c0_4] : memref<9x8x32xbf16, #tpu.memory_space<vmem>>, vector<1x8x32xbf16>
    %13 = vector.shape_cast %12 : vector<1x8x32xbf16> to vector<8x32xbf16>
    %cst = arith.constant dense<0.000000e+00> : vector<64x32xf32>
    %14 = tpu.matmul %11, %13, %cst {dimension_numbers = #tpu.dot_dimension_numbers<[1], [0], [0], [1], [0, 0, 1, 1], [], []>} : vector<64x8xbf16>, vector<8x32xbf16>, vector<64x32xf32> -> vector<64x32xf32>
    %15 = vector.extract_strided_slice %8 {offsets = [0, 0], sizes = [64, 8], strides = [1, 1]} : vector<80x8xbf16> to vector<64x8xbf16>
    %c1 = arith.constant 1 : index
    %c0_5 = arith.constant 0 : index
    %c0_6 = arith.constant 0 : index
    %16 = vector.load %arg3[%c1, %c0_5, %c0_6] : memref<9x8x32xbf16, #tpu.memory_space<vmem>>, vector<1x8x32xbf16>
    %17 = vector.shape_cast %16 : vector<1x8x32xbf16> to vector<8x32xbf16>
    %cst_7 = arith.constant dense<0.000000e+00> : vector<64x32xf32>
    %18 = tpu.matmul %15, %17, %cst_7 {dimension_numbers = #tpu.dot_dimension_numbers<[1], [0], [0], [1], [0, 0, 1, 1], [], []>} : vector<64x8xbf16>, vector<8x32xbf16>, vector<64x32xf32> -> vector<64x32xf32>
    %19 = arith.addf %14, %18 : vector<64x32xf32>
    %20 = vector.extract_strided_slice %10 {offsets = [0, 0], sizes = [64, 8], strides = [1, 1]} : vector<80x8xbf16> to vector<64x8xbf16>
    %c2 = arith.constant 2 : index
    %c0_8 = arith.constant 0 : index
    %c0_9 = arith.constant 0 : index
    %21 = vector.load %arg3[%c2, %c0_8, %c0_9] : memref<9x8x32xbf16, #tpu.memory_space<vmem>>, vector<1x8x32xbf16>
    %22 = vector.shape_cast %21 : vector<1x8x32xbf16> to vector<8x32xbf16>
    %cst_10 = arith.constant dense<0.000000e+00> : vector<64x32xf32>
    %23 = tpu.matmul %20, %22, %cst_10 {dimension_numbers = #tpu.dot_dimension_numbers<[1], [0], [0], [1], [0, 0, 1, 1], [], []>} : vector<64x8xbf16>, vector<8x32xbf16>, vector<64x32xf32> -> vector<64x32xf32>
    %24 = arith.addf %19, %23 : vector<64x32xf32>
    %25 = vector.extract_strided_slice %6 {offsets = [8, 0], sizes = [64, 8], strides = [1, 1]} : vector<80x8xbf16> to vector<64x8xbf16>
    %c3 = arith.constant 3 : index
    %c0_11 = arith.constant 0 : index
    %c0_12 = arith.constant 0 : index
    %26 = vector.load %arg3[%c3, %c0_11, %c0_12] : memref<9x8x32xbf16, #tpu.memory_space<vmem>>, vector<1x8x32xbf16>
    %27 = vector.shape_cast %26 : vector<1x8x32xbf16> to vector<8x32xbf16>
    %cst_13 = arith.constant dense<0.000000e+00> : vector<64x32xf32>
    %28 = tpu.matmul %25, %27, %cst_13 {dimension_numbers = #tpu.dot_dimension_numbers<[1], [0], [0], [1], [0, 0, 1, 1], [], []>} : vector<64x8xbf16>, vector<8x32xbf16>, vector<64x32xf32> -> vector<64x32xf32>
    %29 = arith.addf %24, %28 : vector<64x32xf32>
    %30 = vector.extract_strided_slice %8 {offsets = [8, 0], sizes = [64, 8], strides = [1, 1]} : vector<80x8xbf16> to vector<64x8xbf16>
    %c4 = arith.constant 4 : index
    %c0_14 = arith.constant 0 : index
    %c0_15 = arith.constant 0 : index
    %31 = vector.load %arg3[%c4, %c0_14, %c0_15] : memref<9x8x32xbf16, #tpu.memory_space<vmem>>, vector<1x8x32xbf16>
    %32 = vector.shape_cast %31 : vector<1x8x32xbf16> to vector<8x32xbf16>
    %cst_16 = arith.constant dense<0.000000e+00> : vector<64x32xf32>
    %33 = tpu.matmul %30, %32, %cst_16 {dimension_numbers = #tpu.dot_dimension_numbers<[1], [0], [0], [1], [0, 0, 1, 1], [], []>} : vector<64x8xbf16>, vector<8x32xbf16>, vector<64x32xf32> -> vector<64x32xf32>
    %34 = arith.addf %29, %33 : vector<64x32xf32>
    %35 = vector.extract_strided_slice %10 {offsets = [8, 0], sizes = [64, 8], strides = [1, 1]} : vector<80x8xbf16> to vector<64x8xbf16>
    %c5 = arith.constant 5 : index
    %c0_17 = arith.constant 0 : index
    %c0_18 = arith.constant 0 : index
    %36 = vector.load %arg3[%c5, %c0_17, %c0_18] : memref<9x8x32xbf16, #tpu.memory_space<vmem>>, vector<1x8x32xbf16>
    %37 = vector.shape_cast %36 : vector<1x8x32xbf16> to vector<8x32xbf16>
    %cst_19 = arith.constant dense<0.000000e+00> : vector<64x32xf32>
    %38 = tpu.matmul %35, %37, %cst_19 {dimension_numbers = #tpu.dot_dimension_numbers<[1], [0], [0], [1], [0, 0, 1, 1], [], []>} : vector<64x8xbf16>, vector<8x32xbf16>, vector<64x32xf32> -> vector<64x32xf32>
    %39 = arith.addf %34, %38 : vector<64x32xf32>
    %40 = vector.extract_strided_slice %6 {offsets = [16, 0], sizes = [64, 8], strides = [1, 1]} : vector<80x8xbf16> to vector<64x8xbf16>
    %c6 = arith.constant 6 : index
    %c0_20 = arith.constant 0 : index
    %c0_21 = arith.constant 0 : index
    %41 = vector.load %arg3[%c6, %c0_20, %c0_21] : memref<9x8x32xbf16, #tpu.memory_space<vmem>>, vector<1x8x32xbf16>
    %42 = vector.shape_cast %41 : vector<1x8x32xbf16> to vector<8x32xbf16>
    %cst_22 = arith.constant dense<0.000000e+00> : vector<64x32xf32>
    %43 = tpu.matmul %40, %42, %cst_22 {dimension_numbers = #tpu.dot_dimension_numbers<[1], [0], [0], [1], [0, 0, 1, 1], [], []>} : vector<64x8xbf16>, vector<8x32xbf16>, vector<64x32xf32> -> vector<64x32xf32>
    %44 = arith.addf %39, %43 : vector<64x32xf32>
    %45 = vector.extract_strided_slice %8 {offsets = [16, 0], sizes = [64, 8], strides = [1, 1]} : vector<80x8xbf16> to vector<64x8xbf16>
    %c7 = arith.constant 7 : index
    %c0_23 = arith.constant 0 : index
    %c0_24 = arith.constant 0 : index
    %46 = vector.load %arg3[%c7, %c0_23, %c0_24] : memref<9x8x32xbf16, #tpu.memory_space<vmem>>, vector<1x8x32xbf16>
    %47 = vector.shape_cast %46 : vector<1x8x32xbf16> to vector<8x32xbf16>
    %cst_25 = arith.constant dense<0.000000e+00> : vector<64x32xf32>
    %48 = tpu.matmul %45, %47, %cst_25 {dimension_numbers = #tpu.dot_dimension_numbers<[1], [0], [0], [1], [0, 0, 1, 1], [], []>} : vector<64x8xbf16>, vector<8x32xbf16>, vector<64x32xf32> -> vector<64x32xf32>
    %49 = arith.addf %44, %48 : vector<64x32xf32>
    %50 = vector.extract_strided_slice %10 {offsets = [16, 0], sizes = [64, 8], strides = [1, 1]} : vector<80x8xbf16> to vector<64x8xbf16>
    %c8 = arith.constant 8 : index
    %c0_26 = arith.constant 0 : index
    %c0_27 = arith.constant 0 : index
    %51 = vector.load %arg3[%c8, %c0_26, %c0_27] : memref<9x8x32xbf16, #tpu.memory_space<vmem>>, vector<1x8x32xbf16>
    %52 = vector.shape_cast %51 : vector<1x8x32xbf16> to vector<8x32xbf16>
    %cst_28 = arith.constant dense<0.000000e+00> : vector<64x32xf32>
    %53 = tpu.matmul %50, %52, %cst_28 {dimension_numbers = #tpu.dot_dimension_numbers<[1], [0], [0], [1], [0, 0, 1, 1], [], []>} : vector<64x8xbf16>, vector<8x32xbf16>, vector<64x32xf32> -> vector<64x32xf32>
    %54 = arith.addf %49, %53 : vector<64x32xf32>
    %c0_29 = arith.constant 0 : index
    %c0_30 = arith.constant 0 : index
    %55 = vector.load %arg4[%c0_29, %c0_30] : memref<1x32xf32, #tpu.memory_space<vmem>>, vector<1x32xf32>
    %56 = vector.broadcast %55 : vector<1x32xf32> to vector<64x32xf32>
    %57 = arith.addf %54, %56 : vector<64x32xf32>
    %c0_31 = arith.constant 0 : index
    %c0_32 = arith.constant 0 : index
    %c0_33 = arith.constant 0 : index
    %58 = vector.load %arg5[%c0_31, %c0_32, %c0_33] : memref<1x64x32xf32, #tpu.memory_space<vmem>>, vector<1x64x32xf32>
    %59 = vector.shape_cast %58 : vector<1x64x32xf32> to vector<64x32xf32>
    %60 = vector.shape_cast %57 : vector<64x32xf32> to vector<1x64x32xf32>
    tpu.vector_store %arg5[%c0_31, %c0_32, %c0_33], %60 {strides = array<i32>} : memref<1x64x32xf32, #tpu.memory_space<vmem>>, vector<1x64x32xf32>,
    return
  }
  func.func @transform_0(%arg0: i32, %arg1: i32) -> (i32, i32, i32, i32) {
    %c0_i32 = arith.constant 0 : i32
    %c0_i32_0 = arith.constant 0 : i32
    %c0_i32_1 = arith.constant 0 : i32
    %c0_i32_2 = arith.constant 0 : i32
    return %arg0, %c0_i32, %c0_i32_0, %c0_i32_1 : i32, i32, i32, i32
  }
  func.func @transform_1(%arg0: i32, %arg1: i32) -> (i32, i32, i32) {
    %c0_i32 = arith.constant 0 : i32
    %c0_i32_0 = arith.constant 0 : i32
    %c0_i32_1 = arith.constant 0 : i32
    %c0_i32_2 = arith.constant 0 : i32
    return %c0_i32, %c0_i32_0, %c0_i32_1 : i32, i32, i32
  }
  func.func @transform_2(%arg0: i32, %arg1: i32) -> (i32, i32) {
    %c0_i32 = arith.constant 0 : i32
    %c0_i32_0 = arith.constant 0 : i32
    %c0_i32_1 = arith.constant 0 : i32
    return %c0_i32, %c0_i32_0 : i32, i32
  }
  func.func @transform_3(%arg0: i32, %arg1: i32) -> (i32, i32, i32) {
    %c0_i32 = arith.constant 0 : i32
    %c0_i32_0 = arith.constant 0 : i32
    return %arg0, %arg1, %c0_i32 : i32, i32, i32
  }
}

</mosaic_0001>

<llo_original>
// kernel: tpu_custom_call.1
$region0: #{tpu_custom_call.1}
  #allocation0 [shape = 'u32[]', space=smem, size = 0x4, offset = 0x4, fixed_abs, tag = 'smem constant byte address 0x4 - core index']
  #allocation1 [shape = 'u32[144,128]{1,0:T(1,128)}', space=vmem, size = 0x12000, scoped, tag = 'internal scratch']
  %s0 = inlined_call_operand.vmem [shape: bf16[2,10,10,8], index: 0, kind: input, shape index: {}]
  %s1 = inlined_call_operand.vmem [shape: bf16[9,8,32], index: 1, kind: input, shape index: {}]
  %s2 = inlined_call_operand.vmem [shape: f32[1,32], index: 2, kind: input, shape index: {}]
  %s3 = inlined_call_operand.vmem [shape: f32[2,64,32], index: 3, kind: output, shape index: {}]
  %s4 = sld [smem:[#allocation0]]
  $region45: #{tpu_custom_call.1} parent=0
    _
  %s6 = ssub.s32 1, %s4
  %s7 = scalar_select 0, %s6, %s4
  loop: start=0, step=1, limit=4
  $region2: #{tpu_custom_call.1} parent=0 // loop_pre_header
    _
  $region3: #{tpu_custom_call.1} parent=0 // loop_header
    %s9 = sphi 0, %s13
    %p10 = scmp.ge.s32.totalorder %s9, 4
    %s16 = sphi 0, %s28
    %s17 = sphi 0, %s24
    %s18 = sphi 0, %s16
    %s19 = sphi 0, %s17
    %s20 = sphi 0, %s18
    %s21 = sphi 0, %s19
    %s31 = sphi 0, %s33
    %s34 = sphi 0, %s31
    %s35 = sphi 0, %s34
    %s51 = sphi 0, %s35
    %s55 = sphi 0, %s55
    %s57 = sphi 0, %s55
    %s58 = sphi 0, %s57
    %s72 = sphi 0, %s58
    %s76 = sphi 0, %s76
    %s78 = sphi 0, %s76
    %s79 = sphi 0, %s78
    %s93 = sphi 0, %s79
    %s101 = sphi 0, %s103
    %s104 = sphi 0, %s101
    %s105 = sphi 0, %s104
    %s121 = sphi 0, %s105
  $region4: #{tpu_custom_call.1} parent=0 // loop_header_branch
    %12 = sbr.rel (%p10) target = $region8
  $region5: #{tpu_custom_call.1} parent=0 // loop_body
    %s14 = ssub.s32 %s9, 1
    %s15 = ssub.s32 %s9, 2
    %s22 = sadd.s32 1, %s17
    %p23 = scmp.ge.s32.totalorder %s22, 1
    %s24 = scalar_select %p23, 0, %s22
    %s25 = sadd.s32 1, %s16
    %s26 = scalar_select %p23, %s25, %s16
    %p27 = scmp.ge.s32.totalorder %s26, 2
    %s28 = scalar_select %p27, 0, %s26
    %s29 = ssub.s32 %s16, %s28
    %p30 = scmp.eq.s32.totalorder %s29, 0
    %s32 = sadd.s32 %s31, 1
    %s33 = scalar_select %p30, %s31, %s32
    %p36 = pneg %p30
    %p37 = scmp.eq.s32.totalorder %s9, 1
    %p38 = por %p36, %p37
    %p39 = scmp.ne.s32.totalorder %s31, %s34
    %p40 = scmp.eq.s32.totalorder %s9, 0
    %p41 = por %p39, %p40
    %p42 = scmp.ne.s32.totalorder %s31, %s34
    %p43 = scmp.eq.s32.totalorder %s14, 1
    %p44 = por %p42, %p43
    %p45 = scmp.ne.s32.totalorder %s34, %s35
    %p46 = scmp.eq.s32.totalorder %s14, 0
    %p47 = por %p45, %p46
    %p48 = scmp.ne.s32.totalorder %s34, %s35
    %p49 = scmp.eq.s32.totalorder %s15, 1
    %p50 = por %p48, %p49
    %p52 = scmp.ne.s32.totalorder %s35, %s51
    %p53 = scmp.eq.s32.totalorder %s15, 0
    %p54 = por %p52, %p53
    %s56 = sadd.s32 %s55, 1
    %p59 = scmp.eq.s32.totalorder %s9, 1
    %p60 = scmp.ne.s32.totalorder %s55, %s57
    %p61 = scmp.eq.s32.totalorder %s9, 0
    %p62 = por %p60, %p61
    %p63 = scmp.ne.s32.totalorder %s55, %s57
    %p64 = scmp.eq.s32.totalorder %s14, 1
    %p65 = por %p63, %p64
    %p66 = scmp.ne.s32.totalorder %s57, %s58
    %p67 = scmp.eq.s32.totalorder %s14, 0
    %p68 = por %p66, %p67
    %p69 = scmp.ne.s32.totalorder %s57, %s58
    %p70 = scmp.eq.s32.totalorder %s15, 1
    %p71 = por %p69, %p70
    %p73 = scmp.ne.s32.totalorder %s58, %s72
    %p74 = scmp.eq.s32.totalorder %s15, 0
    %p75 = por %p73, %p74
    %s77 = sadd.s32 %s76, 1
    %p80 = scmp.eq.s32.totalorder %s9, 1
    %p81 = scmp.ne.s32.totalorder %s76, %s78
    %p82 = scmp.eq.s32.totalorder %s9, 0
    %p83 = por %p81, %p82
    %p84 = scmp.ne.s32.totalorder %s76, %s78
    %p85 = scmp.eq.s32.totalorder %s14, 1
    %p86 = por %p84, %p85
    %p87 = scmp.ne.s32.totalorder %s78, %s79
    %p88 = scmp.eq.s32.totalorder %s14, 0
    %p89 = por %p87, %p88
    %p90 = scmp.ne.s32.totalorder %s78, %s79
    %p91 = scmp.eq.s32.totalorder %s15, 1
    %p92 = por %p90, %p91
    %p94 = scmp.ne.s32.totalorder %s79, %s93
    %p95 = scmp.eq.s32.totalorder %s15, 0
    %p96 = por %p94, %p95
    %s97 = ssub.s32 %s16, %s28
    %s98 = ssub.s32 %s17, %s24
    %s99 = sor.u32 %s97, %s98
    %p100 = scmp.eq.s32.totalorder %s99, 0
    %s102 = sadd.s32 %s101, 1
    %s103 = scalar_select %p100, %s101, %s102
    %p106 = pneg %p100
    %p107 = scmp.eq.s32.totalorder %s9, 1
    %p108 = por %p106, %p107
    %p109 = scmp.ne.s32.totalorder %s101, %s104
    %p110 = scmp.eq.s32.totalorder %s9, 0
    %p111 = por %p109, %p110
    %p112 = scmp.ne.s32.totalorder %s101, %s104
    %p113 = scmp.eq.s32.totalorder %s14, 1
    %p114 = por %p112, %p113
    %p115 = scmp.ne.s32.totalorder %s104, %s105
    %p116 = scmp.eq.s32.totalorder %s14, 0
    %p117 = por %p115, %p116
    %p118 = scmp.ne.s32.totalorder %s104, %s105
    %p119 = scmp.eq.s32.totalorder %s15, 1
    %p120 = por %p118, %p119
    %p122 = scmp.ne.s32.totalorder %s105, %s121
    %p123 = scmp.eq.s32.totalorder %s15, 0
    %p124 = por %p122, %p123
    %p125 = scmp.le.s32.totalorder 1, %s9
    %p126 = scmp.lt.s32.totalorder %s9, 3
    %p127 = pnand %p125, %p126
    %p128 = pneg %p127
    // Predicated region
    $region9: #{tpu_custom_call.1} parent=5 // pred_check
      _
    $region10: #{tpu_custom_call.1} parent=5 // pred_check_branch
      %130 = sbr.rel (%p127) target = $region12
    $region11: #{tpu_custom_call.1} parent=5 // pred_region
      %s131 = ssub.s32 %s9, 1
      // Predicated region
      $region13: #{tpu_custom_call.1} parent=11 // pred_check
        %p132 = pneg %p68
      $region14: #{tpu_custom_call.1} parent=11 // pred_check_branch
        %134 = sbr.rel (%p132) target = $region16
      $region15: #{tpu_custom_call.1} parent=11 // pred_region
        _
      $region16: #{tpu_custom_call.1} parent=11 // pred_fallthru
        _
      // Predicated region
      $region17: #{tpu_custom_call.1} parent=11 // pred_check
        %p135 = pneg %p89
      $region18: #{tpu_custom_call.1} parent=11 // pred_check_branch
        %137 = sbr.rel (%p135) target = $region20
      $region19: #{tpu_custom_call.1} parent=11 // pred_region
        _
      $region20: #{tpu_custom_call.1} parent=11 // pred_fallthru
        _
    $region12: #{tpu_custom_call.1} parent=5 // pred_fallthru
      _
    %p138 = scmp.lt.s32.totalorder %s9, 2
    // Predicated region
    $region21: #{tpu_custom_call.1} parent=5 // pred_check
      %p139 = pneg %p138
    $region22: #{tpu_custom_call.1} parent=5 // pred_check_branch
      %141 = sbr.rel (%p139) target = $region24
    $region23: #{tpu_custom_call.1} parent=5 // pred_region
      // Predicated region
      $region25: #{tpu_custom_call.1} parent=23 // pred_check
        %p142 = pneg %p41
      $region26: #{tpu_custom_call.1} parent=23 // pred_check_branch
        %144 = sbr.rel (%p142) target = $region28
      $region27: #{tpu_custom_call.1} parent=23 // pred_region
        %p145 = scmp.lt.s32.totalorder %s16, 1
        %s146 = scalar_select %p145, %s16, 1
        %s147 = smul.addr %s146, 20
        %s148 = smul.addr %s147, 4
        %s149 = scalar_lea.vmem %s0, %s148
      $region28: #{tpu_custom_call.1} parent=23 // pred_fallthru
        _
    $region24: #{tpu_custom_call.1} parent=5 // pred_fallthru
      _
    %p150 = scmp.le.s32.totalorder 1, %s9
    %p151 = scmp.lt.s32.totalorder %s9, 3
    %p152 = pnand %p150, %p151
    %p153 = pneg %p152
    // Predicated region
    $region29: #{tpu_custom_call.1} parent=5 // pred_check
      _
    $region30: #{tpu_custom_call.1} parent=5 // pred_check_branch
      %155 = sbr.rel (%p152) target = $region32
    $region31: #{tpu_custom_call.1} parent=5 // pred_region
      %s156 = ssub.s32 %s9, 1
      %p157 = scmp.lt.s32.totalorder %s18, 1
      %s158 = scalar_select %p157, %s18, 1
      %s159 = smul.addr %s158, 20
      %s160 = smul.addr %s159, 4
      %s161 = scalar_lea.vmem %s0, %s160
      %p162 = pneg %p47
      %p163 = pneg %p44
      %p164 = pneg %p68
      %p165 = pneg %p65
      %p166 = pneg %p89
      %p167 = pneg %p86
      %p168 = pneg %p117
      %p169 = pneg %p114
      %s170 = smul.u32 8, %s19
      %p171 = scmp.lt.s32.totalorder %s18, 1
      %s172 = scalar_select %p171, %s18, 1
      %p173 = scmp.lt.s32.totalorder %s170, 7
      %s174 = scalar_select %p173, %s170, 7
      %s175 = smul.addr %s172, 8
      %s176 = sadd.s32 %s174, %s175
      %s177 = smul.addr %s176, 8
      %s178 = scalar_lea.vmem %s3, %s177
      %p179 = scmp.lt.s32.totalorder %s18, 1
      %s180 = scalar_select %p179, %s18, 1
      %s181 = smul.addr %s180, 20
      %s182 = smul.addr %s181, 4
      %s183 = scalar_lea.vmem %s0, %s182
      %s184 = smul.u32 8, %s19
      %p185 = scmp.lt.s32.totalorder %s18, 1
      %s186 = scalar_select %p185, %s18, 1
      %p187 = scmp.lt.s32.totalorder %s184, 7
      %s188 = scalar_select %p187, %s184, 7
      %s189 = smul.addr %s186, 8
      %s190 = sadd.s32 %s188, %s189
      %s191 = smul.addr %s190, 8
      %s192 = scalar_lea.vmem %s3, %s191
      %s193 = smul.u32 8, %s19
      %s195 = smul.u32 %s19, 8
      %s196 = smul.u32 %s195, 2
      %s197 = smul.addr %s196, 4
      %s198 = scalar_lea.vmem %s183, %s197
      %v199 = vld [vmem:[%s198] sm:$0xf]
      %v200 = vld [vmem:[%s198 + $0x4] sm:$0x1]
      %v201 = vld [vmem:[%s198 + $0x8] sm:$0xf]
      %v202 = vld [vmem:[%s198 + $0xc] sm:$0x1]
      %v203 = vld [vmem:[%s198 + $0x10] sm:$0xf]
      %v204 = vld [vmem:[%s198 + $0x14] sm:$0x1]
      %v205 = vld [vmem:[%s198 + $0x18] sm:$0xf]
      %v206 = vld [vmem:[%s198 + $0x1c] sm:$0x1]
      %v207 = vld [vmem:[%s198 + $0x20] sm:$0xf]
      %v208 = vld [vmem:[%s198 + $0x24] sm:$0x1]
      %v209 = vld [vmem:[%s198 + $0x28] sm:$0xf]
      %v210 = vld [vmem:[%s198 + $0x2c] sm:$0x1]
      %v211 = vld [vmem:[%s198 + $0x30] sm:$0xf]
      %v212 = vld [vmem:[%s198 + $0x34] sm:$0x1]
      %v213 = vld [vmem:[%s198 + $0x38] sm:$0xf]
      %v214 = vld [vmem:[%s198 + $0x3c] sm:$0x1]
      %v215 = vld [vmem:[%s198 + $0x40] sm:$0xf]
      %v216 = vld [vmem:[%s198 + $0x44] sm:$0x1]
      %v217 = vld [vmem:[%s198 + $0x48] sm:$0xf]
      %v218 = vld [vmem:[%s198 + $0x4c] sm:$0x1]
      %vm219 = vsmask.f32 3328
      %vm220 = vsmask.f32 7440
      %vm221 = vmor %vm219, %vm220
      %v223 = vshrl.u32 %v199, 16
      %v225 = vrot.slane %v223, 4
      %v226 = vshll.u32 %v199, 16
      %v228 = vrot.slane %v226, 5
      %v229 = vor.u32 %v225, %v228
      %v230 = vrot.slane %v229, 4
      %v232 = vshll.u32 %v200, 16
      %v234 = vrot.slane %v232, 5
      %v235 = vsel %vm221, %v230, %v234
      %v237 = vshrl.u32 %v201, 16
      %v239 = vrot.slane %v237, 4
      %v240 = vshll.u32 %v201, 16
      %v242 = vrot.slane %v240, 5
      %v243 = vor.u32 %v239, %v242
      %v244 = vrot.slane %v243, 4
      %v246 = vshll.u32 %v202, 16
      %v248 = vrot.slane %v246, 5
      %v249 = vsel %vm221, %v244, %v248
      %v251 = vshrl.u32 %v203, 16
      %v253 = vrot.slane %v251, 4
      %v254 = vshll.u32 %v203, 16
      %v256 = vrot.slane %v254, 5
      %v257 = vor.u32 %v253, %v256
      %v258 = vrot.slane %v257, 4
      %v260 = vshll.u32 %v204, 16
      %v262 = vrot.slane %v260, 5
      %v263 = vsel %vm221, %v258, %v262
      %v265 = vshrl.u32 %v205, 16
      %v267 = vrot.slane %v265, 4
      %v268 = vshll.u32 %v205, 16
      %v270 = vrot.slane %v268, 5
      %v271 = vor.u32 %v267, %v270
      %v272 = vrot.slane %v271, 4
      %v274 = vshll.u32 %v206, 16
      %v276 = vrot.slane %v274, 5
      %v277 = vsel %vm221, %v272, %v276
      %v279 = vshrl.u32 %v207, 16
      %v281 = vrot.slane %v279, 4
      %v282 = vshll.u32 %v207, 16
      %v284 = vrot.slane %v282, 5
      %v285 = vor.u32 %v281, %v284
      %v286 = vrot.slane %v285, 4
      %v288 = vshll.u32 %v208, 16
      %v290 = vrot.slane %v288, 5
      %v291 = vsel %vm221, %v286, %v290
      %v293 = vshrl.u32 %v209, 16
      %v295 = vrot.slane %v293, 4
      %v296 = vshll.u32 %v209, 16
      %v298 = vrot.slane %v296, 5
      %v299 = vor.u32 %v295, %v298
      %v300 = vrot.slane %v299, 4
      %v302 = vshll.u32 %v210, 16
      %v304 = vrot.slane %v302, 5
      %v305 = vsel %vm221, %v300, %v304
      %v307 = vshrl.u32 %v211, 16
      %v309 = vrot.slane %v307, 4
      %v310 = vshll.u32 %v211, 16
      %v312 = vrot.slane %v310, 5
      %v313 = vor.u32 %v309, %v312
      %v314 = vrot.slane %v313, 4
      %v316 = vshll.u32 %v212, 16
      %v318 = vrot.slane %v316, 5
      %v319 = vsel %vm221, %v314, %v318
      %v321 = vshrl.u32 %v213, 16
      %v323 = vrot.slane %v321, 4
      %v324 = vshll.u32 %v213, 16
      %v326 = vrot.slane %v324, 5
      %v327 = vor.u32 %v323, %v326
      %v328 = vrot.slane %v327, 4
      %v330 = vshll.u32 %v214, 16
      %v332 = vrot.slane %v330, 5
      %v333 = vsel %vm221, %v328, %v332
      %v335 = vshrl.u32 %v215, 16
      %v337 = vrot.slane %v335, 4
      %v338 = vshll.u32 %v215, 16
      %v340 = vrot.slane %v338, 5
      %v341 = vor.u32 %v337, %v340
      %v342 = vrot.slane %v341, 4
      %v344 = vshll.u32 %v216, 16
      %v346 = vrot.slane %v344, 5
      %v347 = vsel %vm221, %v342, %v346
      %v349 = vshrl.u32 %v217, 16
      %v351 = vrot.slane %v349, 4
      %v352 = vshll.u32 %v217, 16
      %v354 = vrot.slane %v352, 5
      %v355 = vor.u32 %v351, %v354
      %v356 = vrot.slane %v355, 4
      %v358 = vshll.u32 %v218, 16
      %v360 = vrot.slane %v358, 5
      %v361 = vsel %vm221, %v356, %v360
      %vm382 = vcmask 1042432
      %vm383 = vcmask 1046532
      %vm384 = vmor %vm382, %vm383
      %v385 = vrot.slane %v199, 5
      %v386 = vrot.slane %v385, 4
      %v387 = vrot.slane %v200, 5
      %v388 = vsel %vm384, %v386, %v387
      %v389 = vrot.slane %v201, 5
      %v390 = vrot.slane %v389, 4
      %v391 = vrot.slane %v202, 5
      %v392 = vsel %vm384, %v390, %v391
      %v393 = vrot.slane %v203, 5
      %v394 = vrot.slane %v393, 4
      %v395 = vrot.slane %v204, 5
      %v396 = vsel %vm384, %v394, %v395
      %v397 = vrot.slane %v205, 5
      %v398 = vrot.slane %v397, 4
      %v399 = vrot.slane %v206, 5
      %v400 = vsel %vm384, %v398, %v399
      %v401 = vrot.slane %v207, 5
      %v402 = vrot.slane %v401, 4
      %v403 = vrot.slane %v208, 5
      %v404 = vsel %vm384, %v402, %v403
      %v405 = vrot.slane %v209, 5
      %v406 = vrot.slane %v405, 4
      %v407 = vrot.slane %v210, 5
      %v408 = vsel %vm384, %v406, %v407
      %v409 = vrot.slane %v211, 5
      %v410 = vrot.slane %v409, 4
      %v411 = vrot.slane %v212, 5
      %v412 = vsel %vm384, %v410, %v411
      %v413 = vrot.slane %v213, 5
      %v414 = vrot.slane %v413, 4
      %v415 = vrot.slane %v214, 5
      %v416 = vsel %vm384, %v414, %v415
      %v417 = vrot.slane %v215, 5
      %v418 = vrot.slane %v417, 4
      %v419 = vrot.slane %v216, 5
      %v420 = vsel %vm384, %v418, %v419
      %v421 = vrot.slane %v217, 5
      %v422 = vrot.slane %v421, 4
      %v423 = vrot.slane %v218, 5
      %v424 = vsel %vm384, %v422, %v423
      %v425 = vld [vmem:[%s1] sm:$0xf]
      %s426 = scalar_lea.vmem %s1, 4
      %v427 = vld [vmem:[%s426] sm:$0xf]
      %v428 = vunpack.c.l.b16 %v235
      %v429 = vunpack.c.l.b16 %v249
      %v430 = vunpack.c.l.b16 %v263
      %v431 = vunpack.c.l.b16 %v277
      %v432 = vunpack.c.l.b16 %v291
      %v433 = vunpack.c.l.b16 %v305
      %v434 = vunpack.c.l.b16 %v319
      %v435 = vunpack.c.l.b16 %v333
      %v436 = vpack.c.b16 %v429, %v428
      %v437 = vpack.c.b16 %v431, %v430
      %v438 = vpack.c.b16 %v433, %v432
      %v439 = vpack.c.b16 %v435, %v434
      %vm440 = vcmask 64512
      %v442 = vsel %vm440, %v436, 0
      %v445 = vsel %vm440, %v437, 0
      %v448 = vsel %vm440, %v438, 0
      %v451 = vsel %vm440, %v439, 0
      %vm453 = vcmask 1043456
      %v455 = vsel %vm453, %v427, 0
      %457 = vmatprep.subr.bf16.mxu0 0
      %458 = vmatpush1.bf16.msra.mxu0 0
      %459 = vmatprep.subr.bf16.mxu0 0
      %460 = vmatpush1.bf16.msra.mxu0 0
      %461 = vmatprep.subr.bf16.mxu0 0
      %462 = vmatpush1.bf16.msra.mxu0 0
      %463 = vmatprep.subr.bf16.mxu0 0
      %464 = vmatpush1.bf16.msra.mxu0 0
      %465 = vmatprep.subr.bf16.mxu0 0
      %466 = vmatpush1.bf16.msra.mxu0 0
      %467 = vmatprep.subr.bf16.mxu0 0
      %468 = vmatpush1.bf16.msra.mxu0 0
      %469 = vmatprep.subr.bf16.mxu0 0
      %470 = vmatpush1.bf16.msra.mxu0 0
      %471 = vmatprep.subr.bf16.mxu0 0
      %472 = vmatpush1.bf16.msra.mxu0 %v455
      %473 = vmatprep.subr.bf16.mxu0 0
      %474 = vmatpush2.bf16.msra.mxu0 0
      %475 = vmatprep.subr.bf16.mxu0 0
      %476 = vmatpush2.bf16.msra.mxu0 0
      %477 = vmatprep.subr.bf16.mxu0 0
      %478 = vmatpush2.bf16.msra.mxu0 0
      %479 = vmatprep.subr.bf16.mxu0 0
      %480 = vmatpush2.bf16.msra.mxu0 0
      %481 = vmatprep.subr.bf16.mxu0 0
      %482 = vmatpush2.bf16.msra.mxu0 0
      %483 = vmatprep.subr.bf16.mxu0 0
      %484 = vmatpush2.bf16.msra.mxu0 0
      %485 = vmatprep.subr.bf16.mxu0 0
      %486 = vmatpush2.bf16.msra.mxu0 0
      %487 = vmatprep.subr.bf16.mxu0 0
      %488 = vmatpush2.bf16.msra.mxu0 0
      %489 = vmatprep.mubr.bf16.mxu0 0
      %490 = vmatmul.mubr.bf16.gmra.mxu0 %v442
      %v491 = vpop.f32.mrf.mxu0
      %v492 = vadd.f32 0.0, %v491
      %v493 = vpop.f32.mrf.mxu0
      %v494 = vpop.f32.mrf.mxu0
      %v495 = vadd.f32 0.0, %v494
      %v496 = vpop.f32.mrf.mxu0
      %497 = vmatprep.mubr.bf16.mxu0 0
      %498 = vmatmul.mubr.bf16.gmra.mxu0 %v445
      %v499 = vpop.f32.mrf.mxu0
      %v500 = vadd.f32 0.0, %v499
      %v501 = vpop.f32.mrf.mxu0
      %v502 = vpop.f32.mrf.mxu0
      %v503 = vadd.f32 0.0, %v502
      %v504 = vpop.f32.mrf.mxu0
      %505 = vmatprep.mubr.bf16.mxu0 0
      %506 = vmatmul.mubr.bf16.gmra.mxu0 %v448
      %v507 = vpop.f32.mrf.mxu0
      %v508 = vadd.f32 0.0, %v507
      %v509 = vpop.f32.mrf.mxu0
      %v510 = vpop.f32.mrf.mxu0
      %v511 = vadd.f32 0.0, %v510
      %v512 = vpop.f32.mrf.mxu0
      %513 = vmatprep.mubr.bf16.mxu0 0
      %514 = vmatmul.mubr.bf16.gmra.mxu0 %v451
      %v515 = vpop.f32.mrf.mxu0
      %v516 = vadd.f32 0.0, %v515
      %v517 = vpop.f32.mrf.mxu0
      %v518 = vpop.f32.mrf.mxu0
      %v519 = vadd.f32 0.0, %v518
      %v520 = vpop.f32.mrf.mxu0
      %521 = vdwg.mxu0
      %v522 = vunpack.c.l.b16 %v199
      %v523 = vunpack.c.l.b16 %v201
      %v524 = vunpack.c.l.b16 %v203
      %v525 = vunpack.c.l.b16 %v205
      %v526 = vunpack.c.l.b16 %v207
      %v527 = vunpack.c.l.b16 %v209
      %v528 = vunpack.c.l.b16 %v211
      %v529 = vunpack.c.l.b16 %v213
      %v530 = vpack.c.b16 %v523, %v522
      %v531 = vpack.c.b16 %v525, %v524
      %v532 = vpack.c.b16 %v527, %v526
      %v533 = vpack.c.b16 %v529, %v528
      %v535 = vsel %vm440, %v530, 0
      %v538 = vsel %vm440, %v531, 0
      %v541 = vsel %vm440, %v532, 0
      %v544 = vsel %vm440, %v533, 0
      %v547 = vsel %vm453, %v425, 0
      %549 = vmatprep.subr.bf16.mxu0 0
      %550 = vmatpush1.bf16.msra.mxu0 0
      %551 = vmatprep.subr.bf16.mxu0 0
      %552 = vmatpush1.bf16.msra.mxu0 0
      %553 = vmatprep.subr.bf16.mxu0 0
      %554 = vmatpush1.bf16.msra.mxu0 0
      %555 = vmatprep.subr.bf16.mxu0 0
      %556 = vmatpush1.bf16.msra.mxu0 0
      %557 = vmatprep.subr.bf16.mxu0 0
      %558 = vmatpush1.bf16.msra.mxu0 0
      %559 = vmatprep.subr.bf16.mxu0 0
      %560 = vmatpush1.bf16.msra.mxu0 0
      %561 = vmatprep.subr.bf16.mxu0 0
      %562 = vmatpush1.bf16.msra.mxu0 0
      %563 = vmatprep.subr.bf16.mxu0 0
      %564 = vmatpush1.bf16.msra.mxu0 %v547
      %565 = vmatprep.subr.bf16.mxu0 0
      %566 = vmatpush2.bf16.msra.mxu0 0
      %567 = vmatprep.subr.bf16.mxu0 0
      %568 = vmatpush2.bf16.msra.mxu0 0
      %569 = vmatprep.subr.bf16.mxu0 0
      %570 = vmatpush2.bf16.msra.mxu0 0
      %571 = vmatprep.subr.bf16.mxu0 0
      %572 = vmatpush2.bf16.msra.mxu0 0
      %573 = vmatprep.subr.bf16.mxu0 0
      %574 = vmatpush2.bf16.msra.mxu0 0
      %575 = vmatprep.subr.bf16.mxu0 0
      %576 = vmatpush2.bf16.msra.mxu0 0
      %577 = vmatprep.subr.bf16.mxu0 0
      %578 = vmatpush2.bf16.msra.mxu0 0
      %579 = vmatprep.subr.bf16.mxu0 0
      %580 = vmatpush2.bf16.msra.mxu0 0
      %581 = vmatprep.mubr.bf16.mxu0 0
      %582 = vmatmul.mubr.bf16.gmra.mxu0 %v535
      %v583 = vpop.f32.mrf.mxu0
      %v584 = vadd.f32 %v492, %v583
      %v585 = vpop.f32.mrf.mxu0
      %v586 = vpop.f32.mrf.mxu0
      %v587 = vadd.f32 %v495, %v586
      %v588 = vpop.f32.mrf.mxu0
      %589 = vmatprep.mubr.bf16.mxu0 0
      %590 = vmatmul.mubr.bf16.gmra.mxu0 %v538
      %v591 = vpop.f32.mrf.mxu0
      %v592 = vadd.f32 %v500, %v591
      %v593 = vpop.f32.mrf.mxu0
      %v594 = vpop.f32.mrf.mxu0
      %v595 = vadd.f32 %v503, %v594
      %v596 = vpop.f32.mrf.mxu0
      %597 = vmatprep.mubr.bf16.mxu0 0
      %598 = vmatmul.mubr.bf16.gmra.mxu0 %v541
      %v599 = vpop.f32.mrf.mxu0
      %v600 = vadd.f32 %v508, %v599
      %v601 = vpop.f32.mrf.mxu0
      %v602 = vpop.f32.mrf.mxu0
      %v603 = vadd.f32 %v511, %v602
      %v604 = vpop.f32.mrf.mxu0
      %605 = vmatprep.mubr.bf16.mxu0 0
      %606 = vmatmul.mubr.bf16.gmra.mxu0 %v544
      %v607 = vpop.f32.mrf.mxu0
      %v608 = vadd.f32 %v516, %v607
      %v609 = vpop.f32.mrf.mxu0
      %v610 = vpop.f32.mrf.mxu0
      %v611 = vadd.f32 %v519, %v610
      %v612 = vpop.f32.mrf.mxu0
      %613 = vdwg.mxu0
      %s614 = scalar_lea.vmem %s1, 8
      %v615 = vld [vmem:[%s614] sm:$0xf]
      %v616 = vunpack.c.l.b16 %v388
      %v617 = vunpack.c.l.b16 %v392
      %v618 = vunpack.c.l.b16 %v396
      %v619 = vunpack.c.l.b16 %v400
      %v620 = vunpack.c.l.b16 %v404
      %v621 = vunpack.c.l.b16 %v408
      %v622 = vunpack.c.l.b16 %v412
      %v623 = vunpack.c.l.b16 %v416
      %v624 = vpack.c.b16 %v617, %v616
      %v625 = vpack.c.b16 %v619, %v618
      %v626 = vpack.c.b16 %v621, %v620
      %v627 = vpack.c.b16 %v623, %v622
      %v629 = vsel %vm440, %v624, 0
      %v632 = vsel %vm440, %v625, 0
      %v635 = vsel %vm440, %v626, 0
      %v638 = vsel %vm440, %v627, 0
      %v641 = vsel %vm453, %v615, 0
      %643 = vmatprep.subr.bf16.mxu0 0
      %644 = vmatpush1.bf16.msra.mxu0 0
      %645 = vmatprep.subr.bf16.mxu0 0
      %646 = vmatpush1.bf16.msra.mxu0 0
      %647 = vmatprep.subr.bf16.mxu0 0
      %648 = vmatpush1.bf16.msra.mxu0 0
      %649 = vmatprep.subr.bf16.mxu0 0
      %650 = vmatpush1.bf16.msra.mxu0 0
      %651 = vmatprep.subr.bf16.mxu0 0
      %652 = vmatpush1.bf16.msra.mxu0 0
      %653 = vmatprep.subr.bf16.mxu0 0
      %654 = vmatpush1.bf16.msra.mxu0 0
      %655 = vmatprep.subr.bf16.mxu0 0
      %656 = vmatpush1.bf16.msra.mxu0 0
      %657 = vmatprep.subr.bf16.mxu0 0
      %658 = vmatpush1.bf16.msra.mxu0 %v641
      %659 = vmatprep.subr.bf16.mxu0 0
      %660 = vmatpush2.bf16.msra.mxu0 0
      %661 = vmatprep.subr.bf16.mxu0 0
      %662 = vmatpush2.bf16.msra.mxu0 0
      %663 = vmatprep.subr.bf16.mxu0 0
      %664 = vmatpush2.bf16.msra.mxu0 0
      %665 = vmatprep.subr.bf16.mxu0 0
      %666 = vmatpush2.bf16.msra.mxu0 0
      %667 = vmatprep.subr.bf16.mxu0 0
      %668 = vmatpush2.bf16.msra.mxu0 0
      %669 = vmatprep.subr.bf16.mxu0 0
      %670 = vmatpush2.bf16.msra.mxu0 0
      %671 = vmatprep.subr.bf16.mxu0 0
      %672 = vmatpush2.bf16.msra.mxu0 0
      %673 = vmatprep.subr.bf16.mxu0 0
      %674 = vmatpush2.bf16.msra.mxu0 0
      %675 = vmatprep.mubr.bf16.mxu0 0
      %676 = vmatmul.mubr.bf16.gmra.mxu0 %v629
      %v677 = vpop.f32.mrf.mxu0
      %v678 = vadd.f32 0.0, %v677
      %v679 = vpop.f32.mrf.mxu0
      %v680 = vpop.f32.mrf.mxu0
      %v681 = vadd.f32 0.0, %v680
      %v682 = vpop.f32.mrf.mxu0
      %683 = vmatprep.mubr.bf16.mxu0 0
      %684 = vmatmul.mubr.bf16.gmra.mxu0 %v632
      %v685 = vpop.f32.mrf.mxu0
      %v686 = vadd.f32 0.0, %v685
      %v687 = vpop.f32.mrf.mxu0
      %v688 = vpop.f32.mrf.mxu0
      %v689 = vadd.f32 0.0, %v688
      %v690 = vpop.f32.mrf.mxu0
      %691 = vmatprep.mubr.bf16.mxu0 0
      %692 = vmatmul.mubr.bf16.gmra.mxu0 %v635
      %v693 = vpop.f32.mrf.mxu0
      %v694 = vadd.f32 0.0, %v693
      %v695 = vpop.f32.mrf.mxu0
      %v696 = vpop.f32.mrf.mxu0
      %v697 = vadd.f32 0.0, %v696
      %v698 = vpop.f32.mrf.mxu0
      %699 = vmatprep.mubr.bf16.mxu0 0
      %700 = vmatmul.mubr.bf16.gmra.mxu0 %v638
      %v701 = vpop.f32.mrf.mxu0
      %v702 = vadd.f32 0.0, %v701
      %v703 = vpop.f32.mrf.mxu0
      %v704 = vpop.f32.mrf.mxu0
      %v705 = vadd.f32 0.0, %v704
      %v706 = vpop.f32.mrf.mxu0
      %707 = vdwg.mxu0
      %v708 = vadd.f32 %v584, %v678
      %v709 = vadd.f32 %v587, %v681
      %v710 = vadd.f32 %v592, %v686
      %v711 = vadd.f32 %v595, %v689
      %v712 = vadd.f32 %v600, %v694
      %v713 = vadd.f32 %v603, %v697
      %v714 = vadd.f32 %v608, %v702
      %v715 = vadd.f32 %v611, %v705
      %s716 = scalar_lea.vmem %s1, 12
      %v717 = vld [vmem:[%s716] sm:$0xf]
      %v718 = vunpack.c.l.b16 %v215
      %v719 = vpack.c.b16 %v524, %v523
      %v720 = vpack.c.b16 %v526, %v525
      %v721 = vpack.c.b16 %v528, %v527
      %v722 = vpack.c.b16 %v718, %v529
      %v724 = vsel %vm440, %v719, 0
      %v727 = vsel %vm440, %v720, 0
      %v730 = vsel %vm440, %v721, 0
      %v733 = vsel %vm440, %v722, 0
      %v736 = vsel %vm453, %v717, 0
      %738 = vmatprep.subr.bf16.mxu0 0
      %739 = vmatpush1.bf16.msra.mxu0 0
      %740 = vmatprep.subr.bf16.mxu0 0
      %741 = vmatpush1.bf16.msra.mxu0 0
      %742 = vmatprep.subr.bf16.mxu0 0
      %743 = vmatpush1.bf16.msra.mxu0 0
      %744 = vmatprep.subr.bf16.mxu0 0
      %745 = vmatpush1.bf16.msra.mxu0 0
      %746 = vmatprep.subr.bf16.mxu0 0
      %747 = vmatpush1.bf16.msra.mxu0 0
      %748 = vmatprep.subr.bf16.mxu0 0
      %749 = vmatpush1.bf16.msra.mxu0 0
      %750 = vmatprep.subr.bf16.mxu0 0
      %751 = vmatpush1.bf16.msra.mxu0 0
      %752 = vmatprep.subr.bf16.mxu0 0
      %753 = vmatpush1.bf16.msra.mxu0 %v736
      %754 = vmatprep.subr.bf16.mxu0 0
      %755 = vmatpush2.bf16.msra.mxu0 0
      %756 = vmatprep.subr.bf16.mxu0 0
      %757 = vmatpush2.bf16.msra.mxu0 0
      %758 = vmatprep.subr.bf16.mxu0 0
      %759 = vmatpush2.bf16.msra.mxu0 0
      %760 = vmatprep.subr.bf16.mxu0 0
      %761 = vmatpush2.bf16.msra.mxu0 0
      %762 = vmatprep.subr.bf16.mxu0 0
      %763 = vmatpush2.bf16.msra.mxu0 0
      %764 = vmatprep.subr.bf16.mxu0 0
      %765 = vmatpush2.bf16.msra.mxu0 0
      %766 = vmatprep.subr.bf16.mxu0 0
      %767 = vmatpush2.bf16.msra.mxu0 0
      %768 = vmatprep.subr.bf16.mxu0 0
      %769 = vmatpush2.bf16.msra.mxu0 0
      %770 = vmatprep.mubr.bf16.mxu0 0
      %771 = vmatmul.mubr.bf16.gmra.mxu0 %v724
      %v772 = vpop.f32.mrf.mxu0
      %v773 = vadd.f32 0.0, %v772
      %v774 = vpop.f32.mrf.mxu0
      %v775 = vpop.f32.mrf.mxu0
      %v776 = vadd.f32 0.0, %v775
      %v777 = vpop.f32.mrf.mxu0
      %778 = vmatprep.mubr.bf16.mxu0 0
      %779 = vmatmul.mubr.bf16.gmra.mxu0 %v727
      %v780 = vpop.f32.mrf.mxu0
      %v781 = vadd.f32 0.0, %v780
      %v782 = vpop.f32.mrf.mxu0
      %v783 = vpop.f32.mrf.mxu0
      %v784 = vadd.f32 0.0, %v783
      %v785 = vpop.f32.mrf.mxu0
      %786 = vmatprep.mubr.bf16.mxu0 0
      %787 = vmatmul.mubr.bf16.gmra.mxu0 %v730
      %v788 = vpop.f32.mrf.mxu0
      %v789 = vadd.f32 0.0, %v788
      %v790 = vpop.f32.mrf.mxu0
      %v791 = vpop.f32.mrf.mxu0
      %v792 = vadd.f32 0.0, %v791
      %v793 = vpop.f32.mrf.mxu0
      %794 = vmatprep.mubr.bf16.mxu0 0
      %795 = vmatmul.mubr.bf16.gmra.mxu0 %v733
      %v796 = vpop.f32.mrf.mxu0
      %v797 = vadd.f32 0.0, %v796
      %v798 = vpop.f32.mrf.mxu0
      %v799 = vpop.f32.mrf.mxu0
      %v800 = vadd.f32 0.0, %v799
      %v801 = vpop.f32.mrf.mxu0
      %802 = vdwg.mxu0
      %v803 = vadd.f32 %v708, %v773
      %v804 = vadd.f32 %v709, %v776
      %v805 = vadd.f32 %v710, %v781
      %v806 = vadd.f32 %v711, %v784
      %v807 = vadd.f32 %v712, %v789
      %v808 = vadd.f32 %v713, %v792
      %v809 = vadd.f32 %v714, %v797
      %v810 = vadd.f32 %v715, %v800
      %s811 = scalar_lea.vmem %s1, 16
      %v812 = vld [vmem:[%s811] sm:$0xf]
      %v813 = vunpack.c.l.b16 %v347
      %v814 = vpack.c.b16 %v430, %v429
      %v815 = vpack.c.b16 %v432, %v431
      %v816 = vpack.c.b16 %v434, %v433
      %v817 = vpack.c.b16 %v813, %v435
      %v819 = vsel %vm440, %v814, 0
      %v822 = vsel %vm440, %v815, 0
      %v825 = vsel %vm440, %v816, 0
      %v828 = vsel %vm440, %v817, 0
      %v831 = vsel %vm453, %v812, 0
      %833 = vmatprep.subr.bf16.mxu0 0
      %834 = vmatpush1.bf16.msra.mxu0 0
      %835 = vmatprep.subr.bf16.mxu0 0
      %836 = vmatpush1.bf16.msra.mxu0 0
      %837 = vmatprep.subr.bf16.mxu0 0
      %838 = vmatpush1.bf16.msra.mxu0 0
      %839 = vmatprep.subr.bf16.mxu0 0
      %840 = vmatpush1.bf16.msra.mxu0 0
      %841 = vmatprep.subr.bf16.mxu0 0
      %842 = vmatpush1.bf16.msra.mxu0 0
      %843 = vmatprep.subr.bf16.mxu0 0
      %844 = vmatpush1.bf16.msra.mxu0 0
      %845 = vmatprep.subr.bf16.mxu0 0
      %846 = vmatpush1.bf16.msra.mxu0 0
      %847 = vmatprep.subr.bf16.mxu0 0
      %848 = vmatpush1.bf16.msra.mxu0 %v831
      %849 = vmatprep.subr.bf16.mxu0 0
      %850 = vmatpush2.bf16.msra.mxu0 0
      %851 = vmatprep.subr.bf16.mxu0 0
      %852 = vmatpush2.bf16.msra.mxu0 0
      %853 = vmatprep.subr.bf16.mxu0 0
      %854 = vmatpush2.bf16.msra.mxu0 0
      %855 = vmatprep.subr.bf16.mxu0 0
      %856 = vmatpush2.bf16.msra.mxu0 0
      %857 = vmatprep.subr.bf16.mxu0 0
      %858 = vmatpush2.bf16.msra.mxu0 0
      %859 = vmatprep.subr.bf16.mxu0 0
      %860 = vmatpush2.bf16.msra.mxu0 0
      %861 = vmatprep.subr.bf16.mxu0 0
      %862 = vmatpush2.bf16.msra.mxu0 0
      %863 = vmatprep.subr.bf16.mxu0 0
      %864 = vmatpush2.bf16.msra.mxu0 0
      %865 = vmatprep.mubr.bf16.mxu0 0
      %866 = vmatmul.mubr.bf16.gmra.mxu0 %v819
      %v867 = vpop.f32.mrf.mxu0
      %v868 = vadd.f32 0.0, %v867
      %v869 = vpop.f32.mrf.mxu0
      %v870 = vpop.f32.mrf.mxu0
      %v871 = vadd.f32 0.0, %v870
      %v872 = vpop.f32.mrf.mxu0
      %873 = vmatprep.mubr.bf16.mxu0 0
      %874 = vmatmul.mubr.bf16.gmra.mxu0 %v822
      %v875 = vpop.f32.mrf.mxu0
      %v876 = vadd.f32 0.0, %v875
      %v877 = vpop.f32.mrf.mxu0
      %v878 = vpop.f32.mrf.mxu0
      %v879 = vadd.f32 0.0, %v878
      %v880 = vpop.f32.mrf.mxu0
      %881 = vmatprep.mubr.bf16.mxu0 0
      %882 = vmatmul.mubr.bf16.gmra.mxu0 %v825
      %v883 = vpop.f32.mrf.mxu0
      %v884 = vadd.f32 0.0, %v883
      %v885 = vpop.f32.mrf.mxu0
      %v886 = vpop.f32.mrf.mxu0
      %v887 = vadd.f32 0.0, %v886
      %v888 = vpop.f32.mrf.mxu0
      %889 = vmatprep.mubr.bf16.mxu0 0
      %890 = vmatmul.mubr.bf16.gmra.mxu0 %v828
      %v891 = vpop.f32.mrf.mxu0
      %v892 = vadd.f32 0.0, %v891
      %v893 = vpop.f32.mrf.mxu0
      %v894 = vpop.f32.mrf.mxu0
      %v895 = vadd.f32 0.0, %v894
      %v896 = vpop.f32.mrf.mxu0
      %897 = vdwg.mxu0
      %v898 = vadd.f32 %v803, %v868
      %v899 = vadd.f32 %v804, %v871
      %v900 = vadd.f32 %v805, %v876
      %v901 = vadd.f32 %v806, %v879
      %v902 = vadd.f32 %v807, %v884
      %v903 = vadd.f32 %v808, %v887
      %v904 = vadd.f32 %v809, %v892
      %v905 = vadd.f32 %v810, %v895
      %s906 = scalar_lea.vmem %s1, 20
      %v907 = vld [vmem:[%s906] sm:$0xf]
      %v908 = vunpack.c.l.b16 %v420
      %v909 = vpack.c.b16 %v618, %v617
      %v910 = vpack.c.b16 %v620, %v619
      %v911 = vpack.c.b16 %v622, %v621
      %v912 = vpack.c.b16 %v908, %v623
      %v914 = vsel %vm440, %v909, 0
      %v917 = vsel %vm440, %v910, 0
      %v920 = vsel %vm440, %v911, 0
      %v923 = vsel %vm440, %v912, 0
      %v926 = vsel %vm453, %v907, 0
      %928 = vmatprep.subr.bf16.mxu0 0
      %929 = vmatpush1.bf16.msra.mxu0 0
      %930 = vmatprep.subr.bf16.mxu0 0
      %931 = vmatpush1.bf16.msra.mxu0 0
      %932 = vmatprep.subr.bf16.mxu0 0
      %933 = vmatpush1.bf16.msra.mxu0 0
      %934 = vmatprep.subr.bf16.mxu0 0
      %935 = vmatpush1.bf16.msra.mxu0 0
      %936 = vmatprep.subr.bf16.mxu0 0
      %937 = vmatpush1.bf16.msra.mxu0 0
      %938 = vmatprep.subr.bf16.mxu0 0
      %939 = vmatpush1.bf16.msra.mxu0 0
      %940 = vmatprep.subr.bf16.mxu0 0
      %941 = vmatpush1.bf16.msra.mxu0 0
      %942 = vmatprep.subr.bf16.mxu0 0
      %943 = vmatpush1.bf16.msra.mxu0 %v926
      %944 = vmatprep.subr.bf16.mxu0 0
      %945 = vmatpush2.bf16.msra.mxu0 0
      %946 = vmatprep.subr.bf16.mxu0 0
      %947 = vmatpush2.bf16.msra.mxu0 0
      %948 = vmatprep.subr.bf16.mxu0 0
      %949 = vmatpush2.bf16.msra.mxu0 0
      %950 = vmatprep.subr.bf16.mxu0 0
      %951 = vmatpush2.bf16.msra.mxu0 0
      %952 = vmatprep.subr.bf16.mxu0 0
      %953 = vmatpush2.bf16.msra.mxu0 0
      %954 = vmatprep.subr.bf16.mxu0 0
      %955 = vmatpush2.bf16.msra.mxu0 0
      %956 = vmatprep.subr.bf16.mxu0 0
      %957 = vmatpush2.bf16.msra.mxu0 0
      %958 = vmatprep.subr.bf16.mxu0 0
      %959 = vmatpush2.bf16.msra.mxu0 0
      %960 = vmatprep.mubr.bf16.mxu0 0
      %961 = vmatmul.mubr.bf16.gmra.mxu0 %v914
      %v962 = vpop.f32.mrf.mxu0
      %v963 = vadd.f32 0.0, %v962
      %v964 = vpop.f32.mrf.mxu0
      %v965 = vpop.f32.mrf.mxu0
      %v966 = vadd.f32 0.0, %v965
      %v967 = vpop.f32.mrf.mxu0
      %968 = vmatprep.mubr.bf16.mxu0 0
      %969 = vmatmul.mubr.bf16.gmra.mxu0 %v917
      %v970 = vpop.f32.mrf.mxu0
      %v971 = vadd.f32 0.0, %v970
      %v972 = vpop.f32.mrf.mxu0
      %v973 = vpop.f32.mrf.mxu0
      %v974 = vadd.f32 0.0, %v973
      %v975 = vpop.f32.mrf.mxu0
      %976 = vmatprep.mubr.bf16.mxu0 0
      %977 = vmatmul.mubr.bf16.gmra.mxu0 %v920
      %v978 = vpop.f32.mrf.mxu0
      %v979 = vadd.f32 0.0, %v978
      %v980 = vpop.f32.mrf.mxu0
      %v981 = vpop.f32.mrf.mxu0
      %v982 = vadd.f32 0.0, %v981
      %v983 = vpop.f32.mrf.mxu0
      %984 = vmatprep.mubr.bf16.mxu0 0
      %985 = vmatmul.mubr.bf16.gmra.mxu0 %v923
      %v986 = vpop.f32.mrf.mxu0
      %v987 = vadd.f32 0.0, %v986
      %v988 = vpop.f32.mrf.mxu0
      %v989 = vpop.f32.mrf.mxu0
      %v990 = vadd.f32 0.0, %v989
      %v991 = vpop.f32.mrf.mxu0
      %992 = vdwg.mxu0
      %v993 = vadd.f32 %v898, %v963
      %v994 = vadd.f32 %v899, %v966
      %v995 = vadd.f32 %v900, %v971
      %v996 = vadd.f32 %v901, %v974
      %v997 = vadd.f32 %v902, %v979
      %v998 = vadd.f32 %v903, %v982
      %v999 = vadd.f32 %v904, %v987
      %v1000 = vadd.f32 %v905, %v990
      %s1001 = scalar_lea.vmem %s1, 24
      %v1002 = vld [vmem:[%s1001] sm:$0xf]
      %v1003 = vunpack.c.l.b16 %v217
      %v1004 = vpack.c.b16 %v1003, %v718
      %v1006 = vsel %vm440, %v1004, 0
      %v1009 = vsel %vm453, %v1002, 0
      %1011 = vmatprep.subr.bf16.mxu0 0
      %1012 = vmatpush1.bf16.msra.mxu0 0
      %1013 = vmatprep.subr.bf16.mxu0 0
      %1014 = vmatpush1.bf16.msra.mxu0 0
      %1015 = vmatprep.subr.bf16.mxu0 0
      %1016 = vmatpush1.bf16.msra.mxu0 0
      %1017 = vmatprep.subr.bf16.mxu0 0
      %1018 = vmatpush1.bf16.msra.mxu0 0
      %1019 = vmatprep.subr.bf16.mxu0 0
      %1020 = vmatpush1.bf16.msra.mxu0 0
      %1021 = vmatprep.subr.bf16.mxu0 0
      %1022 = vmatpush1.bf16.msra.mxu0 0
      %1023 = vmatprep.subr.bf16.mxu0 0
      %1024 = vmatpush1.bf16.msra.mxu0 0
      %1025 = vmatprep.subr.bf16.mxu0 0
      %1026 = vmatpush1.bf16.msra.mxu0 %v1009
      %1027 = vmatprep.subr.bf16.mxu0 0
      %1028 = vmatpush2.bf16.msra.mxu0 0
      %1029 = vmatprep.subr.bf16.mxu0 0
      %1030 = vmatpush2.bf16.msra.mxu0 0
      %1031 = vmatprep.subr.bf16.mxu0 0
      %1032 = vmatpush2.bf16.msra.mxu0 0
      %1033 = vmatprep.subr.bf16.mxu0 0
      %1034 = vmatpush2.bf16.msra.mxu0 0
      %1035 = vmatprep.subr.bf16.mxu0 0
      %1036 = vmatpush2.bf16.msra.mxu0 0
      %1037 = vmatprep.subr.bf16.mxu0 0
      %1038 = vmatpush2.bf16.msra.mxu0 0
      %1039 = vmatprep.subr.bf16.mxu0 0
      %1040 = vmatpush2.bf16.msra.mxu0 0
      %1041 = vmatprep.subr.bf16.mxu0 0
      %1042 = vmatpush2.bf16.msra.mxu0 0
      %1043 = vmatprep.mubr.bf16.mxu0 0
      %1044 = vmatmul.mubr.bf16.gmra.mxu0 %v538
      %v1045 = vpop.f32.mrf.mxu0
      %v1046 = vadd.f32 0.0, %v1045
      %v1047 = vpop.f32.mrf.mxu0
      %v1048 = vpop.f32.mrf.mxu0
      %v1049 = vadd.f32 0.0, %v1048
      %v1050 = vpop.f32.mrf.mxu0
      %1051 = vmatprep.mubr.bf16.mxu0 0
      %1052 = vmatmul.mubr.bf16.gmra.mxu0 %v541
      %v1053 = vpop.f32.mrf.mxu0
      %v1054 = vadd.f32 0.0, %v1053
      %v1055 = vpop.f32.mrf.mxu0
      %v1056 = vpop.f32.mrf.mxu0
      %v1057 = vadd.f32 0.0, %v1056
      %v1058 = vpop.f32.mrf.mxu0
      %1059 = vmatprep.mubr.bf16.mxu0 0
      %1060 = vmatmul.mubr.bf16.gmra.mxu0 %v544
      %v1061 = vpop.f32.mrf.mxu0
      %v1062 = vadd.f32 0.0, %v1061
      %v1063 = vpop.f32.mrf.mxu0
      %v1064 = vpop.f32.mrf.mxu0
      %v1065 = vadd.f32 0.0, %v1064
      %v1066 = vpop.f32.mrf.mxu0
      %1067 = vmatprep.mubr.bf16.mxu0 0
      %1068 = vmatmul.mubr.bf16.gmra.mxu0 %v1006
      %v1069 = vpop.f32.mrf.mxu0
      %v1070 = vadd.f32 0.0, %v1069
      %v1071 = vpop.f32.mrf.mxu0
      %v1072 = vpop.f32.mrf.mxu0
      %v1073 = vadd.f32 0.0, %v1072
      %v1074 = vpop.f32.mrf.mxu0
      %1075 = vdwg.mxu0
      %v1076 = vadd.f32 %v993, %v1046
      %v1077 = vadd.f32 %v994, %v1049
      %v1078 = vadd.f32 %v995, %v1054
      %v1079 = vadd.f32 %v996, %v1057
      %v1080 = vadd.f32 %v997, %v1062
      %v1081 = vadd.f32 %v998, %v1065
      %v1082 = vadd.f32 %v999, %v1070
      %v1083 = vadd.f32 %v1000, %v1073
      %s1084 = scalar_lea.vmem %s1, 28
      %v1085 = vld [vmem:[%s1084] sm:$0xf]
      %v1086 = vunpack.c.l.b16 %v361
      %v1087 = vpack.c.b16 %v1086, %v813
      %v1089 = vsel %vm440, %v1087, 0
      %v1092 = vsel %vm453, %v1085, 0
      %1094 = vmatprep.subr.bf16.mxu0 0
      %1095 = vmatpush1.bf16.msra.mxu0 0
      %1096 = vmatprep.subr.bf16.mxu0 0
      %1097 = vmatpush1.bf16.msra.mxu0 0
      %1098 = vmatprep.subr.bf16.mxu0 0
      %1099 = vmatpush1.bf16.msra.mxu0 0
      %1100 = vmatprep.subr.bf16.mxu0 0
      %1101 = vmatpush1.bf16.msra.mxu0 0
      %1102 = vmatprep.subr.bf16.mxu0 0
      %1103 = vmatpush1.bf16.msra.mxu0 0
      %1104 = vmatprep.subr.bf16.mxu0 0
      %1105 = vmatpush1.bf16.msra.mxu0 0
      %1106 = vmatprep.subr.bf16.mxu0 0
      %1107 = vmatpush1.bf16.msra.mxu0 0
      %1108 = vmatprep.subr.bf16.mxu0 0
      %1109 = vmatpush1.bf16.msra.mxu0 %v1092
      %1110 = vmatprep.subr.bf16.mxu0 0
      %1111 = vmatpush2.bf16.msra.mxu0 0
      %1112 = vmatprep.subr.bf16.mxu0 0
      %1113 = vmatpush2.bf16.msra.mxu0 0
      %1114 = vmatprep.subr.bf16.mxu0 0
      %1115 = vmatpush2.bf16.msra.mxu0 0
      %1116 = vmatprep.subr.bf16.mxu0 0
      %1117 = vmatpush2.bf16.msra.mxu0 0
      %1118 = vmatprep.subr.bf16.mxu0 0
      %1119 = vmatpush2.bf16.msra.mxu0 0
      %1120 = vmatprep.subr.bf16.mxu0 0
      %1121 = vmatpush2.bf16.msra.mxu0 0
      %1122 = vmatprep.subr.bf16.mxu0 0
      %1123 = vmatpush2.bf16.msra.mxu0 0
      %1124 = vmatprep.subr.bf16.mxu0 0
      %1125 = vmatpush2.bf16.msra.mxu0 0
      %1126 = vmatprep.mubr.bf16.mxu0 0
      %1127 = vmatmul.mubr.bf16.gmra.mxu0 %v445
      %v1128 = vpop.f32.mrf.mxu0
      %v1129 = vadd.f32 0.0, %v1128
      %v1130 = vpop.f32.mrf.mxu0
      %v1131 = vpop.f32.mrf.mxu0
      %v1132 = vadd.f32 0.0, %v1131
      %v1133 = vpop.f32.mrf.mxu0
      %1134 = vmatprep.mubr.bf16.mxu0 0
      %1135 = vmatmul.mubr.bf16.gmra.mxu0 %v448
      %v1136 = vpop.f32.mrf.mxu0
      %v1137 = vadd.f32 0.0, %v1136
      %v1138 = vpop.f32.mrf.mxu0
      %v1139 = vpop.f32.mrf.mxu0
      %v1140 = vadd.f32 0.0, %v1139
      %v1141 = vpop.f32.mrf.mxu0
      %1142 = vmatprep.mubr.bf16.mxu0 0
      %1143 = vmatmul.mubr.bf16.gmra.mxu0 %v451
      %v1144 = vpop.f32.mrf.mxu0
      %v1145 = vadd.f32 0.0, %v1144
      %v1146 = vpop.f32.mrf.mxu0
      %v1147 = vpop.f32.mrf.mxu0
      %v1148 = vadd.f32 0.0, %v1147
      %v1149 = vpop.f32.mrf.mxu0
      %1150 = vmatprep.mubr.bf16.mxu0 0
      %1151 = vmatmul.mubr.bf16.gmra.mxu0 %v1089
      %v1152 = vpop.f32.mrf.mxu0
      %v1153 = vadd.f32 0.0, %v1152
      %v1154 = vpop.f32.mrf.mxu0
      %v1155 = vpop.f32.mrf.mxu0
      %v1156 = vadd.f32 0.0, %v1155
      %v1157 = vpop.f32.mrf.mxu0
      %1158 = vdwg.mxu0
      %v1159 = vadd.f32 %v1076, %v1129
      %v1160 = vadd.f32 %v1077, %v1132
      %v1161 = vadd.f32 %v1078, %v1137
      %v1162 = vadd.f32 %v1079, %v1140
      %v1163 = vadd.f32 %v1080, %v1145
      %v1164 = vadd.f32 %v1081, %v1148
      %v1165 = vadd.f32 %v1082, %v1153
      %v1166 = vadd.f32 %v1083, %v1156
      %s1167 = scalar_lea.vmem %s1, 32
      %v1168 = vld [vmem:[%s1167] sm:$0xf]
      %v1169 = vunpack.c.l.b16 %v424
      %v1170 = vpack.c.b16 %v1169, %v908
      %v1172 = vsel %vm440, %v1170, 0
      %v1175 = vsel %vm453, %v1168, 0
      %1177 = vmatprep.subr.bf16.mxu0 0
      %1178 = vmatpush1.bf16.msra.mxu0 0
      %1179 = vmatprep.subr.bf16.mxu0 0
      %1180 = vmatpush1.bf16.msra.mxu0 0
      %1181 = vmatprep.subr.bf16.mxu0 0
      %1182 = vmatpush1.bf16.msra.mxu0 0
      %1183 = vmatprep.subr.bf16.mxu0 0
      %1184 = vmatpush1.bf16.msra.mxu0 0
      %1185 = vmatprep.subr.bf16.mxu0 0
      %1186 = vmatpush1.bf16.msra.mxu0 0
      %1187 = vmatprep.subr.bf16.mxu0 0
      %1188 = vmatpush1.bf16.msra.mxu0 0
      %1189 = vmatprep.subr.bf16.mxu0 0
      %1190 = vmatpush1.bf16.msra.mxu0 0
      %1191 = vmatprep.subr.bf16.mxu0 0
      %1192 = vmatpush1.bf16.msra.mxu0 %v1175
      %1193 = vmatprep.subr.bf16.mxu0 0
      %1194 = vmatpush2.bf16.msra.mxu0 0
      %1195 = vmatprep.subr.bf16.mxu0 0
      %1196 = vmatpush2.bf16.msra.mxu0 0
      %1197 = vmatprep.subr.bf16.mxu0 0
      %1198 = vmatpush2.bf16.msra.mxu0 0
      %1199 = vmatprep.subr.bf16.mxu0 0
      %1200 = vmatpush2.bf16.msra.mxu0 0
      %1201 = vmatprep.subr.bf16.mxu0 0
      %1202 = vmatpush2.bf16.msra.mxu0 0
      %1203 = vmatprep.subr.bf16.mxu0 0
      %1204 = vmatpush2.bf16.msra.mxu0 0
      %1205 = vmatprep.subr.bf16.mxu0 0
      %1206 = vmatpush2.bf16.msra.mxu0 0
      %1207 = vmatprep.subr.bf16.mxu0 0
      %1208 = vmatpush2.bf16.msra.mxu0 0
      %1209 = vmatprep.mubr.bf16.mxu0 0
      %1210 = vmatmul.mubr.bf16.gmra.mxu0 %v632
      %v1211 = vpop.f32.mrf.mxu0
      %v1212 = vadd.f32 0.0, %v1211
      %v1213 = vpop.f32.mrf.mxu0
      %v1214 = vpop.f32.mrf.mxu0
      %v1215 = vadd.f32 0.0, %v1214
      %v1216 = vpop.f32.mrf.mxu0
      %1217 = vmatprep.mubr.bf16.mxu0 0
      %1218 = vmatmul.mubr.bf16.gmra.mxu0 %v635
      %v1219 = vpop.f32.mrf.mxu0
      %v1220 = vadd.f32 0.0, %v1219
      %v1221 = vpop.f32.mrf.mxu0
      %v1222 = vpop.f32.mrf.mxu0
      %v1223 = vadd.f32 0.0, %v1222
      %v1224 = vpop.f32.mrf.mxu0
      %1225 = vmatprep.mubr.bf16.mxu0 0
      %1226 = vmatmul.mubr.bf16.gmra.mxu0 %v638
      %v1227 = vpop.f32.mrf.mxu0
      %v1228 = vadd.f32 0.0, %v1227
      %v1229 = vpop.f32.mrf.mxu0
      %v1230 = vpop.f32.mrf.mxu0
      %v1231 = vadd.f32 0.0, %v1230
      %v1232 = vpop.f32.mrf.mxu0
      %1233 = vmatprep.mubr.bf16.mxu0 0
      %1234 = vmatmul.mubr.bf16.gmra.mxu0 %v1172
      %v1235 = vpop.f32.mrf.mxu0
      %v1236 = vadd.f32 0.0, %v1235
      %v1237 = vpop.f32.mrf.mxu0
      %v1238 = vpop.f32.mrf.mxu0
      %v1239 = vadd.f32 0.0, %v1238
      %v1240 = vpop.f32.mrf.mxu0
      %1241 = vdwg.mxu0
      %v1242 = vadd.f32 %v1159, %v1212
      %v1243 = vadd.f32 %v1160, %v1215
      %v1244 = vadd.f32 %v1161, %v1220
      %v1245 = vadd.f32 %v1162, %v1223
      %v1246 = vadd.f32 %v1163, %v1228
      %v1247 = vadd.f32 %v1164, %v1231
      %v1248 = vadd.f32 %v1165, %v1236
      %v1249 = vadd.f32 %v1166, %v1239
      %v1250 = vld [vmem:[%s2] sm:$0x1]
      %v1252 = vlaneseq
      %v1253 = vshrl.u32 %v1252, 7
      %v1254 = vsub.s32 0, %v1253
      %v1255 = vrot.slane %v1250, %v1254
      %v1257 = vadd.f32 %v1242, %v1255
      %v1258 = vadd.f32 %v1243, %v1255
      %v1259 = vadd.f32 %v1244, %v1255
      %v1260 = vadd.f32 %v1245, %v1255
      %v1261 = vadd.f32 %v1246, %v1255
      %v1262 = vadd.f32 %v1247, %v1255
      %v1263 = vadd.f32 %v1248, %v1255
      %v1264 = vadd.f32 %v1249, %v1255
      %vm1265 = vcmask 261120
      %1266 = vst.msk [vmem:[%s192] sm:$0xff] %vm1265, %v1257
      %1267 = vst.msk [vmem:[%s192 + $0x8] sm:$0xff] %vm1265, %v1258
      %1268 = vst.msk [vmem:[%s192 + $0x10] sm:$0xff] %vm1265, %v1259
      %1269 = vst.msk [vmem:[%s192 + $0x18] sm:$0xff] %vm1265, %v1260
      %1270 = vst.msk [vmem:[%s192 + $0x20] sm:$0xff] %vm1265, %v1261
      %1271 = vst.msk [vmem:[%s192 + $0x28] sm:$0xff] %vm1265, %v1262
      %1272 = vst.msk [vmem:[%s192 + $0x30] sm:$0xff] %vm1265, %v1263
      %1273 = vst.msk [vmem:[%s192 + $0x38] sm:$0xff] %vm1265, %v1264
      %s1274 = smul.u32 8, %s19
      %p1275 = scmp.lt.s32.totalorder %s18, 1
      %s1276 = scalar_select %p1275, %s18, 1
      %p1277 = scmp.lt.s32.totalorder %s1274, 7
      %s1278 = scalar_select %p1277, %s1274, 7
      %s1279 = smul.addr %s1276, 8
      %s1280 = sadd.s32 %s1278, %s1279
      %s1281 = smul.addr %s1280, 8
      %s1282 = scalar_lea.vmem %s3, %s1281
      // Predicated region
      $region33: #{tpu_custom_call.1} parent=31 // pred_check
        %p1283 = pneg %p114
      $region34: #{tpu_custom_call.1} parent=31 // pred_check_branch
        %1285 = sbr.rel (%p1283) target = $region36
      $region35: #{tpu_custom_call.1} parent=31 // pred_region
        %s1286 = smul.u32 8, %s19
      $region36: #{tpu_custom_call.1} parent=31 // pred_fallthru
        _
    $region32: #{tpu_custom_call.1} parent=5 // pred_fallthru
      _
    %p1287 = scmp.le.s32.totalorder 2, %s9
    // Predicated region
    $region37: #{tpu_custom_call.1} parent=5 // pred_check
      %p1288 = pneg %p1287
    $region38: #{tpu_custom_call.1} parent=5 // pred_check_branch
      %1290 = sbr.rel (%p1288) target = $region40
    $region39: #{tpu_custom_call.1} parent=5 // pred_region
      %s1291 = ssub.s32 %s9, 2
      // Predicated region
      $region41: #{tpu_custom_call.1} parent=39 // pred_check
        %p1292 = pneg %p120
      $region42: #{tpu_custom_call.1} parent=39 // pred_check_branch
        %1294 = sbr.rel (%p1292) target = $region44
      $region43: #{tpu_custom_call.1} parent=39 // pred_region
        %s1295 = smul.u32 8, %s21
        %p1296 = scmp.lt.s32.totalorder %s20, 1
        %s1297 = scalar_select %p1296, %s20, 1
        %p1298 = scmp.lt.s32.totalorder %s1295, 7
        %s1299 = scalar_select %p1298, %s1295, 7
        %s1300 = smul.addr %s1297, 8
        %s1301 = sadd.s32 %s1299, %s1300
        %s1302 = smul.addr %s1301, 8
        %s1303 = scalar_lea.vmem %s3, %s1302
      $region44: #{tpu_custom_call.1} parent=39 // pred_fallthru
        _
    $region40: #{tpu_custom_call.1} parent=5 // pred_fallthru
      _
  $region6: #{tpu_custom_call.1} parent=0 // loop_footer
    %s13 = sadd.s32 1, %s9
  $region7: #{tpu_custom_call.1} parent=0 // loop_footer_branch
    %8 = sbr.rel target = $region3
  $region8: #{tpu_custom_call.1} parent=0 // loop_exit
    _

</llo_original>
